<compile_context>
chip_gen: v7x
topology: tpu7x:2x2x1
jax: 0.10.0
libtpu: 0.0.40
codegen_flags: <defaults>
</compile_context>

<pallas_src>
import jax
import jax.numpy as jnp
from jax.experimental import pallas as pl
from jax.experimental.pallas import tpu as pltpu


# ----------------------------------------------------------------------------- kernel

def resnet_block_kernel(x_ref, t1_ref, t2_ref, b1_ref, b2_ref, o_ref):
    # x_ref : (1, R+2, L)  one image, 2-row-packed, zero "super-row" padding in H
    # t*_ref: (3, L, L)    row-shift banded conv operators (BN scale folded in)
    # b*_ref: (1, L)       BN bias tiled across the packed lane dim
    # o_ref : (1, R, L)
    _, rp2, L = x_ref.shape
    R = rp2 - 2

    x_pad = x_ref[0].astype(jnp.float32)                       # (R+2, L)

    def conv_bn(inp_pad, t_ref, b_ref):
        # 3x3 conv == sum of 3 row-shifted (R, L) @ (L, L) matmuls; the width taps
        # and zero width-padding are encoded inside the banded T matrices.
        acc = jnp.zeros((R, L), jnp.float32)
        for d in range(3):                                     # d - 1 = super-row shift
            acc = acc + jnp.dot(
                inp_pad[d:d + R, :],
                t_ref[d].astype(jnp.float32),
                preferred_element_type=jnp.float32,
            )
        return acc + b_ref[...].astype(jnp.float32)            # (R, L)

    # conv_block1: conv -> BN -> ReLU
    y = jnp.maximum(conv_bn(x_pad, t1_ref, b1_ref), 0.0)

    # conv_block2: conv -> BN, then residual add + ReLU
    zero_row = jnp.zeros((1, L), jnp.float32)
    y_pad = jnp.concatenate([zero_row, y, zero_row], axis=0)   # (R+2, L)
    z = conv_bn(y_pad, t2_ref, b2_ref) + x_pad[1:R + 1, :]
    o_ref[...] = jnp.maximum(z, 0.0)[None].astype(o_ref.dtype)


# ------------------------------------------------------------------- weight preparation

def _band_matrix(w_dy, W):
    """w_dy: (3, C, C) taps [dx, c_in, c_out] for one dy.  Returns (W*C, W*C) banded
    matrix B with B[w_in*C+i, w_out*C+o] = w_dy[w_in-w_out+1, i, o] for |w_in-w_out|<=1,
    else 0 (this encodes the padding=1 behaviour along width)."""
    C = w_dy.shape[-1]
    w_in = jnp.arange(W)[:, None]
    w_out = jnp.arange(W)[None, :]
    dx = w_in - w_out + 1                                      # (W, W)
    valid = ((dx >= 0) & (dx <= 2)).astype(w_dy.dtype)
    blocks = w_dy[jnp.clip(dx, 0, 2)] * valid[..., None, None]  # (W, W, C, C)
    return blocks.transpose(0, 2, 1, 3).reshape(W * C, W * C)


def build_row_shift_weights(w_hwio, W):
    """w_hwio: (3, 3, C, C).  Returns T: (3, 2*W*C, 2*W*C), the conv expressed as three
    super-row-shift matmuls acting on 2-row-packed activations [row 2r | row 2r+1]."""
    C = w_hwio.shape[-1]
    WC = W * C
    b_m1 = _band_matrix(w_hwio[0], W)   # input row = output row - 1
    b_0 = _band_matrix(w_hwio[1], W)    # input row = output row
    b_p1 = _band_matrix(w_hwio[2], W)   # input row = output row + 1
    z = jnp.zeros((WC, WC), w_hwio.dtype)
    t_m1 = jnp.block([[z, z], [b_m1, z]])          # super-row shift -1
    t_0 = jnp.block([[b_0, b_m1], [b_p1, b_0]])    # super-row shift  0
    t_p1 = jnp.block([[z, b_p1], [z, z]])          # super-row shift +1
    return jnp.stack([t_m1, t_0, t_p1], axis=0)


def fold_bn(gamma, beta, mean, var, eps=1e-5):
    scale = gamma / jnp.sqrt(var + eps)
    bias = beta - mean * scale
    return scale, bias


# ------------------------------------------------------------------------------ wrapper

def resnet_block(x_nchw, w1_oihw, w2_oihw, s1, b1, s2, b2):
    """ResNetBlock forward (eval-mode BN). PyTorch conventions at the boundary:
    x: (N, C, H, W); w*: (C, C, 3, 3) OIHW; s*/b*: (C,) folded BN scale/bias."""
    N, C, H, W = x_nchw.shape
    assert H % 2 == 0, "2-row lane packing requires even H"
    R, L = H // 2, 2 * W * C

    # OIHW -> HWIO and fold the BN scale into the conv weights (constant transform).
    w1 = jnp.transpose(w1_oihw, (2, 3, 1, 0)) * s1[None, None, None, :]
    w2 = jnp.transpose(w2_oihw, (2, 3, 1, 0)) * s2[None, None, None, :]

    t1 = build_row_shift_weights(w1, W)                        # (3, L, L)
    t2 = build_row_shift_weights(w2, W)
    b1_row = jnp.tile(b1, 2 * W).reshape(1, L)
    b2_row = jnp.tile(b2, 2 * W).reshape(1, L)

    # Layout plumbing: NCHW -> NHWC -> 2-row-packed (N, H/2, 2*W*C), zero-pad in H.
    x_packed = jnp.transpose(x_nchw, (0, 2, 3, 1)).reshape(N, R, L)
    x_packed = jnp.pad(x_packed, ((0, 0), (1, 1), (0, 0)))     # (N, R+2, L)

    out_packed = pl.pallas_call(
        resnet_block_kernel,
        out_shape=jax.ShapeDtypeStruct((N, R, L), x_nchw.dtype),
        grid_spec=pltpu.PrefetchScalarGridSpec(
            num_scalar_prefetch=0,
            grid=(N,),
            in_specs=[
                pl.BlockSpec((1, R + 2, L), lambda n: (n, 0, 0)),
                pl.BlockSpec((3, L, L), lambda n: (0, 0, 0)),
                pl.BlockSpec((3, L, L), lambda n: (0, 0, 0)),
                pl.BlockSpec((1, L), lambda n: (0, 0)),
                pl.BlockSpec((1, L), lambda n: (0, 0)),
            ],
            out_specs=pl.BlockSpec((1, R, L), lambda n: (n, 0, 0)),
        ),
        compiler_params=pltpu.CompilerParams(
            dimension_semantics=("parallel",),      # v7x: shard batch over both TCs
            vmem_limit_bytes=32 * 1024 * 1024,      # explicit; usage here is < 1 MiB
        ),
    )(x_packed, t1, t2, b1_row, b2_row)

    # Back to PyTorch layout.
    out_nhwc = out_packed.reshape(N, H, W, C)
    return jnp.transpose(out_nhwc, (0, 3, 1, 2))


# --------------------------------------------------------------------------- reference

def reference_block(x_nhwc, w1_hwio, w2_hwio, s1, b1, s2, b2):
    """Pure-JAX reference (NHWC / HWIO, unfolded weights)."""
    def conv(a, w):
        return jax.lax.conv_general_dilated(
            a, w, window_strides=(1, 1), padding=((1, 1), (1, 1)),
            dimension_numbers=("NHWC", "HWIO", "NHWC"))
    y = jnp.maximum(conv(x_nhwc, w1_hwio) * s1 + b1, 0.0)
    z = conv(y, w2_hwio) * s2 + b2 + x_nhwc
    return jnp.maximum(z, 0.0)


if __name__ == "__main__":
    N, C, H, W = 2, 4, 16, 16  # num_filters = 4
    keys = jax.random.split(jax.random.PRNGKey(0), 11)

    # PyTorch-convention tensors (NCHW input, OIHW weights), deterministic init.
    x_nchw = jax.random.normal(keys[0], (N, C, H, W), jnp.float32)
    w1_oihw = 0.1 * jax.random.normal(keys[1], (C, C, 3, 3), jnp.float32)
    w2_oihw = 0.1 * jax.random.normal(keys[2], (C, C, 3, 3), jnp.float32)

    gamma1 = 1.0 + 0.1 * jax.random.normal(keys[3], (C,), jnp.float32)
    beta1 = 0.1 * jax.random.normal(keys[4], (C,), jnp.float32)
    mean1 = 0.1 * jax.random.normal(keys[5], (C,), jnp.float32)
    var1 = jnp.abs(jax.random.normal(keys[6], (C,), jnp.float32)) + 0.5

    gamma2 = 1.0 + 0.1 * jax.random.normal(keys[7], (C,), jnp.float32)
    beta2 = 0.1 * jax.random.normal(keys[8], (C,), jnp.float32)
    mean2 = 0.1 * jax.random.normal(keys[9], (C,), jnp.float32)
    var2 = jnp.abs(jax.random.normal(keys[10], (C,), jnp.float32)) + 0.5

    s1, b1 = fold_bn(gamma1, beta1, mean1, var1)
    s2, b2 = fold_bn(gamma2, beta2, mean2, var2)

    # Pallas kernel (PyTorch layout in / out).
    out_nchw = resnet_block(x_nchw, w1_oihw, w2_oihw, s1, b1, s2, b2)
    out_nchw = jax.block_until_ready(out_nchw)
    assert out_nchw.shape == (N, C, H, W)

    # Reference check.
    x_nhwc = jnp.transpose(x_nchw, (0, 2, 3, 1))
    w1_hwio = jnp.transpose(w1_oihw, (2, 3, 1, 0))
    w2_hwio = jnp.transpose(w2_oihw, (2, 3, 1, 0))
    ref_nchw = jnp.transpose(
        reference_block(x_nhwc, w1_hwio, w2_hwio, s1, b1, s2, b2), (0, 3, 1, 2))
    assert jnp.allclose(out_nchw, ref_nchw, rtol=1e-4, atol=1e-4)

    print("KERNEL_OK")
</pallas_src>

<mosaic_0001>
module attributes {stable_mosaic.version = 11 : i64} {
  func.func @resnet_block_kernel(%arg0: i32, %arg1: memref<1x10x128xf32, #tpu.memory_space<vmem>>, %arg2: memref<3x128x128xf32, #tpu.memory_space<vmem>>, %arg3: memref<3x128x128xf32, #tpu.memory_space<vmem>>, %arg4: memref<1x128xf32, #tpu.memory_space<vmem>>, %arg5: memref<1x128xf32, #tpu.memory_space<vmem>>, %arg6: memref<1x8x128xf32, #tpu.memory_space<vmem>>) attributes {dimension_semantics = [#tpu.dimension_semantics<parallel>], iteration_bounds = array<i64: 2>, scalar_prefetch = 0 : i64, scratch_operands = 0 : i64, tpu.core_type = #tpu.core_type<tc>, window_params = [{transform_indices = @transform_0, window_bounds = array<i64: 1, 10, 128>}, {pipeline_mode = #tpu.pipeline_mode<synchronous>, transform_indices = @transform_1, window_bounds = array<i64: 3, 128, 128>}, {pipeline_mode = #tpu.pipeline_mode<synchronous>, transform_indices = @transform_2, window_bounds = array<i64: 3, 128, 128>}, {pipeline_mode = #tpu.pipeline_mode<synchronous>, transform_indices = @transform_3, window_bounds = array<i64: 1, 128>}, {pipeline_mode = #tpu.pipeline_mode<synchronous>, transform_indices = @transform_4, window_bounds = array<i64: 1, 128>}, {transform_indices = @transform_5, window_bounds = array<i64: 1, 8, 128>}]} {
    %c0 = arith.constant 0 : index
    %c0_0 = arith.constant 0 : index
    %c0_1 = arith.constant 0 : index
    %0 = vector.load %arg1[%c0, %c0_0, %c0_1] : memref<1x10x128xf32, #tpu.memory_space<vmem>>, vector<1x10x128xf32>
    %1 = vector.shape_cast %0 : vector<1x10x128xf32> to vector<10x128xf32>
    %cst = arith.constant 0.000000e+00 : f32
    %2 = vector.broadcast %cst : f32 to vector<8x128xf32>
    %3 = vector.extract_strided_slice %1 {offsets = [0, 0], sizes = [8, 128], strides = [1, 1]} : vector<10x128xf32> to vector<8x128xf32>
    %c0_2 = arith.constant 0 : index
    %c0_3 = arith.constant 0 : index
    %c0_4 = arith.constant 0 : index
    %4 = vector.load %arg2[%c0_2, %c0_3, %c0_4] : memref<3x128x128xf32, #tpu.memory_space<vmem>>, vector<1x128x128xf32>
    %5 = vector.shape_cast %4 : vector<1x128x128xf32> to vector<128x128xf32>
    %cst_5 = arith.constant dense<0.000000e+00> : vector<8x128xf32>
    %6 = tpu.matmul %3, %5, %cst_5 {dimension_numbers = #tpu.dot_dimension_numbers<[1], [0], [0], [1], [0, 0, 1, 1], [], []>} : vector<8x128xf32>, vector<128x128xf32>, vector<8x128xf32> -> vector<8x128xf32>
    %7 = arith.addf %2, %6 : vector<8x128xf32>
    %8 = vector.extract_strided_slice %1 {offsets = [1, 0], sizes = [8, 128], strides = [1, 1]} : vector<10x128xf32> to vector<8x128xf32>
    %c1 = arith.constant 1 : index
    %c0_6 = arith.constant 0 : index
    %c0_7 = arith.constant 0 : index
    %9 = vector.load %arg2[%c1, %c0_6, %c0_7] : memref<3x128x128xf32, #tpu.memory_space<vmem>>, vector<1x128x128xf32>
    %10 = vector.shape_cast %9 : vector<1x128x128xf32> to vector<128x128xf32>
    %cst_8 = arith.constant dense<0.000000e+00> : vector<8x128xf32>
    %11 = tpu.matmul %8, %10, %cst_8 {dimension_numbers = #tpu.dot_dimension_numbers<[1], [0], [0], [1], [0, 0, 1, 1], [], []>} : vector<8x128xf32>, vector<128x128xf32>, vector<8x128xf32> -> vector<8x128xf32>
    %12 = arith.addf %7, %11 : vector<8x128xf32>
    %13 = vector.extract_strided_slice %1 {offsets = [2, 0], sizes = [8, 128], strides = [1, 1]} : vector<10x128xf32> to vector<8x128xf32>
    %c2 = arith.constant 2 : index
    %c0_9 = arith.constant 0 : index
    %c0_10 = arith.constant 0 : index
    %14 = vector.load %arg2[%c2, %c0_9, %c0_10] : memref<3x128x128xf32, #tpu.memory_space<vmem>>, vector<1x128x128xf32>
    %15 = vector.shape_cast %14 : vector<1x128x128xf32> to vector<128x128xf32>
    %cst_11 = arith.constant dense<0.000000e+00> : vector<8x128xf32>
    %16 = tpu.matmul %13, %15, %cst_11 {dimension_numbers = #tpu.dot_dimension_numbers<[1], [0], [0], [1], [0, 0, 1, 1], [], []>} : vector<8x128xf32>, vector<128x128xf32>, vector<8x128xf32> -> vector<8x128xf32>
    %17 = arith.addf %12, %16 : vector<8x128xf32>
    %c0_12 = arith.constant 0 : index
    %c0_13 = arith.constant 0 : index
    %18 = vector.load %arg4[%c0_12, %c0_13] : memref<1x128xf32, #tpu.memory_space<vmem>>, vector<1x128xf32>
    %19 = vector.broadcast %18 : vector<1x128xf32> to vector<8x128xf32>
    %20 = arith.addf %17, %19 : vector<8x128xf32>
    %cst_14 = arith.constant 0.000000e+00 : f32
    %21 = vector.broadcast %cst_14 : f32 to vector<8x128xf32>
    %22 = arith.maximumf %20, %21 : vector<8x128xf32>
    %cst_15 = arith.constant 0.000000e+00 : f32
    %23 = vector.broadcast %cst_15 : f32 to vector<1x128xf32>
    %24 = tpu.concatenate %23, %22, %23 in 0 : vector<1x128xf32>, vector<8x128xf32>, vector<1x128xf32> -> vector<10x128xf32>
    %cst_16 = arith.constant 0.000000e+00 : f32
    %25 = vector.broadcast %cst_16 : f32 to vector<8x128xf32>
    %26 = vector.extract_strided_slice %24 {offsets = [0, 0], sizes = [8, 128], strides = [1, 1]} : vector<10x128xf32> to vector<8x128xf32>
    %c0_17 = arith.constant 0 : index
    %c0_18 = arith.constant 0 : index
    %c0_19 = arith.constant 0 : index
    %27 = vector.load %arg3[%c0_17, %c0_18, %c0_19] : memref<3x128x128xf32, #tpu.memory_space<vmem>>, vector<1x128x128xf32>
    %28 = vector.shape_cast %27 : vector<1x128x128xf32> to vector<128x128xf32>
    %cst_20 = arith.constant dense<0.000000e+00> : vector<8x128xf32>
    %29 = tpu.matmul %26, %28, %cst_20 {dimension_numbers = #tpu.dot_dimension_numbers<[1], [0], [0], [1], [0, 0, 1, 1], [], []>} : vector<8x128xf32>, vector<128x128xf32>, vector<8x128xf32> -> vector<8x128xf32>
    %30 = arith.addf %25, %29 : vector<8x128xf32>
    %31 = vector.extract_strided_slice %24 {offsets = [1, 0], sizes = [8, 128], strides = [1, 1]} : vector<10x128xf32> to vector<8x128xf32>
    %c1_21 = arith.constant 1 : index
    %c0_22 = arith.constant 0 : index
    %c0_23 = arith.constant 0 : index
    %32 = vector.load %arg3[%c1_21, %c0_22, %c0_23] : memref<3x128x128xf32, #tpu.memory_space<vmem>>, vector<1x128x128xf32>
    %33 = vector.shape_cast %32 : vector<1x128x128xf32> to vector<128x128xf32>
    %cst_24 = arith.constant dense<0.000000e+00> : vector<8x128xf32>
    %34 = tpu.matmul %31, %33, %cst_24 {dimension_numbers = #tpu.dot_dimension_numbers<[1], [0], [0], [1], [0, 0, 1, 1], [], []>} : vector<8x128xf32>, vector<128x128xf32>, vector<8x128xf32> -> vector<8x128xf32>
    %35 = arith.addf %30, %34 : vector<8x128xf32>
    %36 = vector.extract_strided_slice %24 {offsets = [2, 0], sizes = [8, 128], strides = [1, 1]} : vector<10x128xf32> to vector<8x128xf32>
    %c2_25 = arith.constant 2 : index
    %c0_26 = arith.constant 0 : index
    %c0_27 = arith.constant 0 : index
    %37 = vector.load %arg3[%c2_25, %c0_26, %c0_27] : memref<3x128x128xf32, #tpu.memory_space<vmem>>, vector<1x128x128xf32>
    %38 = vector.shape_cast %37 : vector<1x128x128xf32> to vector<128x128xf32>
    %cst_28 = arith.constant dense<0.000000e+00> : vector<8x128xf32>
    %39 = tpu.matmul %36, %38, %cst_28 {dimension_numbers = #tpu.dot_dimension_numbers<[1], [0], [0], [1], [0, 0, 1, 1], [], []>} : vector<8x128xf32>, vector<128x128xf32>, vector<8x128xf32> -> vector<8x128xf32>
    %40 = arith.addf %35, %39 : vector<8x128xf32>
    %c0_29 = arith.constant 0 : index
    %c0_30 = arith.constant 0 : index
    %41 = vector.load %arg5[%c0_29, %c0_30] : memref<1x128xf32, #tpu.memory_space<vmem>>, vector<1x128xf32>
    %42 = vector.broadcast %41 : vector<1x128xf32> to vector<8x128xf32>
    %43 = arith.addf %40, %42 : vector<8x128xf32>
    %44 = vector.extract_strided_slice %1 {offsets = [1, 0], sizes = [8, 128], strides = [1, 1]} : vector<10x128xf32> to vector<8x128xf32>
    %45 = arith.addf %43, %44 : vector<8x128xf32>
    %cst_31 = arith.constant 0.000000e+00 : f32
    %46 = vector.broadcast %cst_31 : f32 to vector<8x128xf32>
    %47 = arith.maximumf %45, %46 : vector<8x128xf32>
    %48 = vector.shape_cast %47 : vector<8x128xf32> to vector<1x8x128xf32>
    %c0_32 = arith.constant 0 : index
    %c0_33 = arith.constant 0 : index
    %c0_34 = arith.constant 0 : index
    %49 = vector.load %arg6[%c0_32, %c0_33, %c0_34] : memref<1x8x128xf32, #tpu.memory_space<vmem>>, vector<1x8x128xf32>
    tpu.vector_store %arg6[%c0_32, %c0_33, %c0_34], %48 {strides = array<i32>} : memref<1x8x128xf32, #tpu.memory_space<vmem>>, vector<1x8x128xf32>,
    return
  }
  func.func @transform_0(%arg0: i32) -> (i32, i32, i32) {
    %c0_i32 = arith.constant 0 : i32
    %c0_i32_0 = arith.constant 0 : i32
    %c0_i32_1 = arith.constant 0 : i32
    return %arg0, %c0_i32, %c0_i32_0 : i32, i32, i32
  }
  func.func @transform_1(%arg0: i32) -> (i32, i32, i32) {
    %c0_i32 = arith.constant 0 : i32
    %c0_i32_0 = arith.constant 0 : i32
    %c0_i32_1 = arith.constant 0 : i32
    %c0_i32_2 = arith.constant 0 : i32
    return %c0_i32, %c0_i32_0, %c0_i32_1 : i32, i32, i32
  }
  func.func @transform_2(%arg0: i32) -> (i32, i32, i32) {
    %c0_i32 = arith.constant 0 : i32
    %c0_i32_0 = arith.constant 0 : i32
    %c0_i32_1 = arith.constant 0 : i32
    %c0_i32_2 = arith.constant 0 : i32
    return %c0_i32, %c0_i32_0, %c0_i32_1 : i32, i32, i32
  }
  func.func @transform_3(%arg0: i32) -> (i32, i32) {
    %c0_i32 = arith.constant 0 : i32
    %c0_i32_0 = arith.constant 0 : i32
    %c0_i32_1 = arith.constant 0 : i32
    return %c0_i32, %c0_i32_0 : i32, i32
  }
  func.func @transform_4(%arg0: i32) -> (i32, i32) {
    %c0_i32 = arith.constant 0 : i32
    %c0_i32_0 = arith.constant 0 : i32
    %c0_i32_1 = arith.constant 0 : i32
    return %c0_i32, %c0_i32_0 : i32, i32
  }
  func.func @transform_5(%arg0: i32) -> (i32, i32, i32) {
    %c0_i32 = arith.constant 0 : i32
    %c0_i32_0 = arith.constant 0 : i32
    %c0_i32_1 = arith.constant 0 : i32
    return %arg0, %c0_i32, %c0_i32_0 : i32, i32, i32
  }
}

</mosaic_0001>

<llo_original>
// kernel: tpu_custom_call.1
$region0: #{tpu_custom_call.1}
  #allocation0 [shape = 'u32[]', space=smem, size = 0x4, offset = 0x4, fixed_abs, tag = 'smem constant byte address 0x4 - core index']
  #allocation1 [shape = 'u32[144,128]{1,0:T(1,128)}', space=vmem, size = 0x12000, scoped, tag = 'internal scratch']
  %s0 = inlined_call_operand.vmem [shape: f32[2,10,128], index: 0, kind: input, shape index: {}]
  %s1 = inlined_call_operand.hbm [shape: f32[3,128,128], index: 1, kind: input, shape index: {}]
  %s2 = inlined_call_operand.hbm [shape: f32[3,128,128], index: 2, kind: input, shape index: {}]
  %s3 = inlined_call_operand.vmem [shape: f32[1,128], index: 3, kind: input, shape index: {}]
  %s4 = inlined_call_operand.vmem [shape: f32[1,128], index: 4, kind: input, shape index: {}]
  %s5 = inlined_call_operand.hbm [shape: f32[2,8,128], index: 5, kind: output, shape index: {}]
  %s6 = sld [smem:[#allocation0]]
  $region61: #{tpu_custom_call.1} parent=0
    _
  %s8 = ssub.s32 1, %s6
  %s9 = scalar_select 0, %s8, %s6
  $region1: #{tpu_custom_call.1} parent=0
    #allocation2 [shape = 'u8[196608]{0}', space=vmem, size = 0x30000, scoped, tag = 'input window, operand 1, single buffered']
    #allocation3 [shape = 's32[2]{0}', space=sflag, size = 0x8, scoped, tag = 'scoped memory for tpu_custom_call.1']
    #allocation4 [shape = 's32[2]{0}', space=sflag, size = 0x8, scoped, tag = 'scoped memory for tpu_custom_call.1']
    #allocation5 [shape = 'u8[196608]{0}', space=vmem, size = 0x30000, scoped, tag = 'input window, operand 2, single buffered']
    #allocation6 [shape = 's32[1]{0}', space=sflag, size = 0x4, scoped, tag = 'scoped memory for tpu_custom_call.1']
    #allocation7 [shape = 'u8[8192]{0}', space=vmem, size = 0x2000, scoped, tag = 'output window, operand 0']
    %10 = vsyncpa [#allocation3], 0
    %11 = vsyncpa [#allocation6], 0
    %12 = vsyncpa [#allocation4], 0
    %s13 = scalar_lea.sflag [#allocation4], 1
    %14 = vsyncpa %s13, 0
    loop: start=0, step=1, limit=4
    $region2: #{tpu_custom_call.1} parent=1 // loop_pre_header
      _
    $region3: #{tpu_custom_call.1} parent=1 // loop_header
      %s16 = sphi 0, %s20
      %p17 = scmp.ge.s32.totalorder %s16, 4
      %s26 = sphi 0, %s28
      %s29 = sphi 0, %s26
      %s30 = sphi 0, %s29
      %s46 = sphi 0, %s30
      %s50 = sphi 0, %s50
      %s52 = sphi 0, %s50
      %s53 = sphi 0, %s52
      %s67 = sphi 0, %s53
      %s71 = sphi 0, %s71
      %s73 = sphi 0, %s71
      %s74 = sphi 0, %s73
      %s88 = sphi 0, %s74
      %s92 = sphi 0, %s92
      %s94 = sphi 0, %s92
      %s95 = sphi 0, %s94
      %s109 = sphi 0, %s95
      %s113 = sphi 0, %s113
      %s115 = sphi 0, %s113
      %s116 = sphi 0, %s115
      %s130 = sphi 0, %s116
      %s136 = sphi 0, %s138
      %s139 = sphi 0, %s136
      %s140 = sphi 0, %s139
      %s156 = sphi 0, %s140
    $region4: #{tpu_custom_call.1} parent=1 // loop_header_branch
      %19 = sbr.rel (%p17) target = $region8
    $region5: #{tpu_custom_call.1} parent=1 // loop_body
      %s21 = ssub.s32 %s16, 1
      %s22 = ssub.s32 %s16, 2
      %s23 = sadd.s32 %s16, 1
      %s24 = ssub.s32 %s16, %s23
      %p25 = scmp.eq.s32.totalorder %s24, 0
      %s27 = sadd.s32 %s26, 1
      %s28 = scalar_select %p25, %s26, %s27
      %p31 = pneg %p25
      %p32 = scmp.eq.s32.totalorder %s16, 1
      %p33 = por %p31, %p32
      %p34 = scmp.ne.s32.totalorder %s26, %s29
      %p35 = scmp.eq.s32.totalorder %s16, 0
      %p36 = por %p34, %p35
      %p37 = scmp.ne.s32.totalorder %s26, %s29
      %p38 = scmp.eq.s32.totalorder %s21, 1
      %p39 = por %p37, %p38
      %p40 = scmp.ne.s32.totalorder %s29, %s30
      %p41 = scmp.eq.s32.totalorder %s21, 0
      %p42 = por %p40, %p41
      %p43 = scmp.ne.s32.totalorder %s29, %s30
      %p44 = scmp.eq.s32.totalorder %s22, 1
      %p45 = por %p43, %p44
      %p47 = scmp.ne.s32.totalorder %s30, %s46
      %p48 = scmp.eq.s32.totalorder %s22, 0
      %p49 = por %p47, %p48
      %s51 = sadd.s32 %s50, 1
      %p54 = scmp.eq.s32.totalorder %s16, 1
      %p55 = scmp.ne.s32.totalorder %s50, %s52
      %p56 = scmp.eq.s32.totalorder %s16, 0
      %p57 = por %p55, %p56
      %p58 = scmp.ne.s32.totalorder %s50, %s52
      %p59 = scmp.eq.s32.totalorder %s21, 1
      %p60 = por %p58, %p59
      %p61 = scmp.ne.s32.totalorder %s52, %s53
      %p62 = scmp.eq.s32.totalorder %s21, 0
      %p63 = por %p61, %p62
      %p64 = scmp.ne.s32.totalorder %s52, %s53
      %p65 = scmp.eq.s32.totalorder %s22, 1
      %p66 = por %p64, %p65
      %p68 = scmp.ne.s32.totalorder %s53, %s67
      %p69 = scmp.eq.s32.totalorder %s22, 0
      %p70 = por %p68, %p69
      %s72 = sadd.s32 %s71, 1
      %p75 = scmp.eq.s32.totalorder %s16, 1
      %p76 = scmp.ne.s32.totalorder %s71, %s73
      %p77 = scmp.eq.s32.totalorder %s16, 0
      %p78 = por %p76, %p77
      %p79 = scmp.ne.s32.totalorder %s71, %s73
      %p80 = scmp.eq.s32.totalorder %s21, 1
      %p81 = por %p79, %p80
      %p82 = scmp.ne.s32.totalorder %s73, %s74
      %p83 = scmp.eq.s32.totalorder %s21, 0
      %p84 = por %p82, %p83
      %p85 = scmp.ne.s32.totalorder %s73, %s74
      %p86 = scmp.eq.s32.totalorder %s22, 1
      %p87 = por %p85, %p86
      %p89 = scmp.ne.s32.totalorder %s74, %s88
      %p90 = scmp.eq.s32.totalorder %s22, 0
      %p91 = por %p89, %p90
      %s93 = sadd.s32 %s92, 1
      %p96 = scmp.eq.s32.totalorder %s16, 1
      %p97 = scmp.ne.s32.totalorder %s92, %s94
      %p98 = scmp.eq.s32.totalorder %s16, 0
      %p99 = por %p97, %p98
      %p100 = scmp.ne.s32.totalorder %s92, %s94
      %p101 = scmp.eq.s32.totalorder %s21, 1
      %p102 = por %p100, %p101
      %p103 = scmp.ne.s32.totalorder %s94, %s95
      %p104 = scmp.eq.s32.totalorder %s21, 0
      %p105 = por %p103, %p104
      %p106 = scmp.ne.s32.totalorder %s94, %s95
      %p107 = scmp.eq.s32.totalorder %s22, 1
      %p108 = por %p106, %p107
      %p110 = scmp.ne.s32.totalorder %s95, %s109
      %p111 = scmp.eq.s32.totalorder %s22, 0
      %p112 = por %p110, %p111
      %s114 = sadd.s32 %s113, 1
      %p117 = scmp.eq.s32.totalorder %s16, 1
      %p118 = scmp.ne.s32.totalorder %s113, %s115
      %p119 = scmp.eq.s32.totalorder %s16, 0
      %p120 = por %p118, %p119
      %p121 = scmp.ne.s32.totalorder %s113, %s115
      %p122 = scmp.eq.s32.totalorder %s21, 1
      %p123 = por %p121, %p122
      %p124 = scmp.ne.s32.totalorder %s115, %s116
      %p125 = scmp.eq.s32.totalorder %s21, 0
      %p126 = por %p124, %p125
      %p127 = scmp.ne.s32.totalorder %s115, %s116
      %p128 = scmp.eq.s32.totalorder %s22, 1
      %p129 = por %p127, %p128
      %p131 = scmp.ne.s32.totalorder %s116, %s130
      %p132 = scmp.eq.s32.totalorder %s22, 0
      %p133 = por %p131, %p132
      %s134 = ssub.s32 %s16, %s23
      %p135 = scmp.eq.s32.totalorder %s134, 0
      %s137 = sadd.s32 %s136, 1
      %s138 = scalar_select %p135, %s136, %s137
      %p141 = pneg %p135
      %p142 = scmp.eq.s32.totalorder %s16, 1
      %p143 = por %p141, %p142
      %p144 = scmp.ne.s32.totalorder %s136, %s139
      %p145 = scmp.eq.s32.totalorder %s16, 0
      %p146 = por %p144, %p145
      %p147 = scmp.ne.s32.totalorder %s136, %s139
      %p148 = scmp.eq.s32.totalorder %s21, 1
      %p149 = por %p147, %p148
      %p150 = scmp.ne.s32.totalorder %s139, %s140
      %p151 = scmp.eq.s32.totalorder %s21, 0
      %p152 = por %p150, %p151
      %p153 = scmp.ne.s32.totalorder %s139, %s140
      %p154 = scmp.eq.s32.totalorder %s22, 1
      %p155 = por %p153, %p154
      %p157 = scmp.ne.s32.totalorder %s140, %s156
      %p158 = scmp.eq.s32.totalorder %s22, 0
      %p159 = por %p157, %p158
      %p160 = scmp.le.s32.totalorder 1, %s16
      %p161 = scmp.lt.s32.totalorder %s16, 3
      %p162 = pnand %p160, %p161
      %p163 = pneg %p162
      // Predicated region
      $region9: #{tpu_custom_call.1} parent=5 // pred_check
        _
      $region10: #{tpu_custom_call.1} parent=5 // pred_check_branch
        %165 = sbr.rel (%p162) target = $region12
      $region11: #{tpu_custom_call.1} parent=5 // pred_region
        %s166 = ssub.s32 %s16, 1
        // Predicated region
        $region13: #{tpu_custom_call.1} parent=11 // pred_check
          %p167 = pneg %p63
        $region14: #{tpu_custom_call.1} parent=11 // pred_check_branch
          %169 = sbr.rel (%p167) target = $region16
        $region15: #{tpu_custom_call.1} parent=11 // pred_region
          %s171 = ssub.s32 6144, 6144
          %172 = vsyncadd [#allocation3], %s171
          %s173 = sshll.u32 [#allocation2], 4
          %s174 = int_to_ptr.vmem [resolvable:$true] %s173
          %179 = dma.hbm_to_vmem [thread:$0]  %s1, 6144, %s174, [#allocation3], 128, 128, 8
        $region16: #{tpu_custom_call.1} parent=11 // pred_fallthru
          _
        // Predicated region
        $region17: #{tpu_custom_call.1} parent=11 // pred_check
          %p180 = pneg %p84
        $region18: #{tpu_custom_call.1} parent=11 // pred_check_branch
          %182 = sbr.rel (%p180) target = $region20
        $region19: #{tpu_custom_call.1} parent=11 // pred_region
          %s184 = ssub.s32 6144, 6144
          %185 = vsyncadd [#allocation6], %s184
          %s186 = sshll.u32 [#allocation5], 4
          %s187 = int_to_ptr.vmem [resolvable:$true] %s186
          %192 = dma.hbm_to_vmem [thread:$0]  %s2, 6144, %s187, [#allocation6], 128, 128, 8
        $region20: #{tpu_custom_call.1} parent=11 // pred_fallthru
          _
        // Predicated region
        $region21: #{tpu_custom_call.1} parent=11 // pred_check
          %p193 = pneg %p105
        $region22: #{tpu_custom_call.1} parent=11 // pred_check_branch
          %195 = sbr.rel (%p193) target = $region24
        $region23: #{tpu_custom_call.1} parent=11 // pred_region
          _
        $region24: #{tpu_custom_call.1} parent=11 // pred_fallthru
          _
        // Predicated region
        $region25: #{tpu_custom_call.1} parent=11 // pred_check
          %p196 = pneg %p126
        $region26: #{tpu_custom_call.1} parent=11 // pred_check_branch
          %198 = sbr.rel (%p196) target = $region28
        $region27: #{tpu_custom_call.1} parent=11 // pred_region
          _
        $region28: #{tpu_custom_call.1} parent=11 // pred_fallthru
          _
      $region12: #{tpu_custom_call.1} parent=5 // pred_fallthru
        _
      %p199 = scmp.lt.s32.totalorder %s16, 2
      // Predicated region
      $region29: #{tpu_custom_call.1} parent=5 // pred_check
        %p200 = pneg %p199
      $region30: #{tpu_custom_call.1} parent=5 // pred_check_branch
        %202 = sbr.rel (%p200) target = $region32
      $region31: #{tpu_custom_call.1} parent=5 // pred_region
        // Predicated region
        $region33: #{tpu_custom_call.1} parent=31 // pred_check
          %p203 = pneg %p36
        $region34: #{tpu_custom_call.1} parent=31 // pred_check_branch
          %205 = sbr.rel (%p203) target = $region36
        $region35: #{tpu_custom_call.1} parent=31 // pred_region
          %p206 = scmp.lt.s32.totalorder %s16, 1
          %s207 = scalar_select %p206, %s16, 1
          %s208 = smul.addr %s207, 2
          %s209 = smul.addr %s208, 8
          %s210 = scalar_lea.vmem %s0, %s209
        $region36: #{tpu_custom_call.1} parent=31 // pred_fallthru
          _
      $region32: #{tpu_custom_call.1} parent=5 // pred_fallthru
        _
      %p211 = scmp.le.s32.totalorder 1, %s16
      %p212 = scmp.lt.s32.totalorder %s16, 3
      %p213 = pnand %p211, %p212
      %p214 = pneg %p213
      // Predicated region
      $region37: #{tpu_custom_call.1} parent=5 // pred_check
        _
      $region38: #{tpu_custom_call.1} parent=5 // pred_check_branch
        %216 = sbr.rel (%p213) target = $region40
      $region39: #{tpu_custom_call.1} parent=5 // pred_region
        %s217 = ssub.s32 %s16, 1
        // Predicated region
        $region41: #{tpu_custom_call.1} parent=39 // pred_check
          %p218 = pneg %p63
        $region42: #{tpu_custom_call.1} parent=39 // pred_check_branch
          %220 = sbr.rel (%p218) target = $region44
        $region43: #{tpu_custom_call.1} parent=39 // pred_region
          %221 = dma.done [#allocation3], 6144
        $region44: #{tpu_custom_call.1} parent=39 // pred_fallthru
          _
        // Predicated region
        $region45: #{tpu_custom_call.1} parent=39 // pred_check
          %p222 = pneg %p84
        $region46: #{tpu_custom_call.1} parent=39 // pred_check_branch
          %224 = sbr.rel (%p222) target = $region48
        $region47: #{tpu_custom_call.1} parent=39 // pred_region
          %225 = dma.done [#allocation6], 6144
        $region48: #{tpu_custom_call.1} parent=39 // pred_fallthru
          _
        %p226 = scmp.lt.s32.totalorder %s21, 1
        %s227 = scalar_select %p226, %s21, 1
        %s228 = smul.addr %s227, 2
        %s229 = smul.addr %s228, 8
        %s230 = scalar_lea.vmem %s0, %s229
        %p231 = pneg %p42
        %p232 = pneg %p39
        %p233 = pneg %p63
        %p234 = pneg %p60
        %p235 = pneg %p84
        %p236 = pneg %p81
        %p237 = pneg %p105
        %p238 = pneg %p102
        %p239 = pneg %p126
        %p240 = pneg %p123
        %p241 = pneg %p152
        %p242 = pneg %p149
        %s243 = sand.u32 %s139, 1
        %s244 = scalar_lea.sflag [#allocation4], %s243
        %s245 = sand.u32 %s139, 1
        %s246 = smul.addr %s245, 8
        %s247 = scalar_lea.vmem [#allocation7], %s246
        %p248 = scmp.lt.s32.totalorder %s21, 1
        %s249 = scalar_select %p248, %s21, 1
        %s250 = smul.addr %s249, 2
        %s251 = smul.addr %s250, 8
        %s252 = scalar_lea.vmem %s0, %s251
        %v253 = vld [vmem:[%s252] sm:$0xff]
        %v254 = vld [vmem:[%s252 + $0x8] sm:$0x3]
        %v255 = vld [vmem:[#allocation2] sm:$0xff]
        %v256 = vld [vmem:[#allocation2 + $0x8] sm:$0xff]
        %v257 = vld [vmem:[#allocation2 + $0x10] sm:$0xff]
        %v258 = vld [vmem:[#allocation2 + $0x18] sm:$0xff]
        %v259 = vld [vmem:[#allocation2 + $0x20] sm:$0xff]
        %v260 = vld [vmem:[#allocation2 + $0x28] sm:$0xff]
        %v261 = vld [vmem:[#allocation2 + $0x30] sm:$0xff]
        %v262 = vld [vmem:[#allocation2 + $0x38] sm:$0xff]
        %v263 = vld [vmem:[#allocation2 + $0x40] sm:$0xff]
        %v264 = vld [vmem:[#allocation2 + $0x48] sm:$0xff]
        %v265 = vld [vmem:[#allocation2 + $0x50] sm:$0xff]
        %v266 = vld [vmem:[#allocation2 + $0x58] sm:$0xff]
        %v267 = vld [vmem:[#allocation2 + $0x60] sm:$0xff]
        %v268 = vld [vmem:[#allocation2 + $0x68] sm:$0xff]
        %v269 = vld [vmem:[#allocation2 + $0x70] sm:$0xff]
        %v270 = vld [vmem:[#allocation2 + $0x78] sm:$0xff]
        %s271 = scalar_lea.vmem [#allocation2], 128
        %v272 = vld [vmem:[%s271] sm:$0xff]
        %v273 = vld [vmem:[%s271 + $0x8] sm:$0xff]
        %v274 = vld [vmem:[%s271 + $0x10] sm:$0xff]
        %v275 = vld [vmem:[%s271 + $0x18] sm:$0xff]
        %v276 = vld [vmem:[%s271 + $0x20] sm:$0xff]
        %v277 = vld [vmem:[%s271 + $0x28] sm:$0xff]
        %v278 = vld [vmem:[%s271 + $0x30] sm:$0xff]
        %v279 = vld [vmem:[%s271 + $0x38] sm:$0xff]
        %v280 = vld [vmem:[%s271 + $0x40] sm:$0xff]
        %v281 = vld [vmem:[%s271 + $0x48] sm:$0xff]
        %v282 = vld [vmem:[%s271 + $0x50] sm:$0xff]
        %v283 = vld [vmem:[%s271 + $0x58] sm:$0xff]
        %v284 = vld [vmem:[%s271 + $0x60] sm:$0xff]
        %v285 = vld [vmem:[%s271 + $0x68] sm:$0xff]
        %v286 = vld [vmem:[%s271 + $0x70] sm:$0xff]
        %v287 = vld [vmem:[%s271 + $0x78] sm:$0xff]
        %vm290 = vcmask 1046528
        %v291 = vrot.slane %v253, 1
        %v292 = vrot.slane %v254, 1
        %v293 = vsel %vm290, %v291, %v292
        %295 = vmatprep.subr.mxu0 0.0
        %296 = vmatpush1.msra.mxu0 %v272
        %297 = vmatprep.subr.mxu0 0.0
        %298 = vmatpush1.msra.mxu0 %v273
        %299 = vmatprep.subr.mxu0 0.0
        %300 = vmatpush1.msra.mxu0 %v274
        %301 = vmatprep.subr.mxu0 0.0
        %302 = vmatpush1.msra.mxu0 %v275
        %303 = vmatprep.subr.mxu0 0.0
        %304 = vmatpush1.msra.mxu0 %v276
        %305 = vmatprep.subr.mxu0 0.0
        %306 = vmatpush1.msra.mxu0 %v277
        %307 = vmatprep.subr.mxu0 0.0
        %308 = vmatpush1.msra.mxu0 %v278
        %309 = vmatprep.subr.mxu0 0.0
        %310 = vmatpush1.msra.mxu0 %v279
        %311 = vmatprep.subr.mxu0 0.0
        %312 = vmatpush1.msra.mxu0 %v280
        %313 = vmatprep.subr.mxu0 0.0
        %314 = vmatpush1.msra.mxu0 %v281
        %315 = vmatprep.subr.mxu0 0.0
        %316 = vmatpush1.msra.mxu0 %v282
        %317 = vmatprep.subr.mxu0 0.0
        %318 = vmatpush1.msra.mxu0 %v283
        %319 = vmatprep.subr.mxu0 0.0
        %320 = vmatpush1.msra.mxu0 %v284
        %321 = vmatprep.subr.mxu0 0.0
        %322 = vmatpush1.msra.mxu0 %v285
        %323 = vmatprep.subr.mxu0 0.0
        %324 = vmatpush1.msra.mxu0 %v286
        %325 = vmatprep.subr.mxu0 0.0
        %326 = vmatpush1.msra.mxu0 %v287
        %327 = vmatprep.subr.mxu0 0.0
        %328 = vmatpush1.msra.mxu0 0.0
        %329 = vmatprep.subr.mxu0 0.0
        %330 = vmatpush1.msra.mxu0 0.0
        %331 = vmatprep.subr.mxu0 0.0
        %332 = vmatpush1.msra.mxu0 0.0
        %333 = vmatprep.subr.mxu0 0.0
        %334 = vmatpush1.msra.mxu0 0.0
        %335 = vmatprep.subr.mxu0 0.0
        %336 = vmatpush1.msra.mxu0 0.0
        %337 = vmatprep.subr.mxu0 0.0
        %338 = vmatpush1.msra.mxu0 0.0
        %339 = vmatprep.subr.mxu0 0.0
        %340 = vmatpush1.msra.mxu0 0.0
        %341 = vmatprep.subr.mxu0 0.0
        %342 = vmatpush1.msra.mxu0 0.0
        %343 = vmatprep.subr.mxu0 0.0
        %344 = vmatpush1.msra.mxu0 0.0
        %345 = vmatprep.subr.mxu0 0.0
        %346 = vmatpush1.msra.mxu0 0.0
        %347 = vmatprep.subr.mxu0 0.0
        %348 = vmatpush1.msra.mxu0 0.0
        %349 = vmatprep.subr.mxu0 0.0
        %350 = vmatpush1.msra.mxu0 0.0
        %351 = vmatprep.subr.mxu0 0.0
        %352 = vmatpush1.msra.mxu0 0.0
        %353 = vmatprep.subr.mxu0 0.0
        %354 = vmatpush1.msra.mxu0 0.0
        %355 = vmatprep.subr.mxu0 0.0
        %356 = vmatpush1.msra.mxu0 0.0
        %357 = vmatprep.subr.mxu0 0.0
        %358 = vmatpush1.msra.mxu0 0.0
        %359 = vmatprep.mubr.f32.mxu0 0.0
        %360 = vmatmul.mubr.f32.gmra.mrb[0].mxu0 %v293
        %v361 = vpop.f32.mrb[0].mxu0
        %v362 = vadd.f32 0.0, %v361
        %v363 = vpop.f32.mrb[0].mxu0
        %364 = vdwg.mxu0
        %365 = vmatprep.subr.mxu0 0.0
        %366 = vmatpush1.msra.mxu0 %v255
        %367 = vmatprep.subr.mxu0 0.0
        %368 = vmatpush1.msra.mxu0 %v256
        %369 = vmatprep.subr.mxu0 0.0
        %370 = vmatpush1.msra.mxu0 %v257
        %371 = vmatprep.subr.mxu0 0.0
        %372 = vmatpush1.msra.mxu0 %v258
        %373 = vmatprep.subr.mxu0 0.0
        %374 = vmatpush1.msra.mxu0 %v259
        %375 = vmatprep.subr.mxu0 0.0
        %376 = vmatpush1.msra.mxu0 %v260
        %377 = vmatprep.subr.mxu0 0.0
        %378 = vmatpush1.msra.mxu0 %v261
        %379 = vmatprep.subr.mxu0 0.0
        %380 = vmatpush1.msra.mxu0 %v262
        %381 = vmatprep.subr.mxu0 0.0
        %382 = vmatpush1.msra.mxu0 %v263
        %383 = vmatprep.subr.mxu0 0.0
        %384 = vmatpush1.msra.mxu0 %v264
        %385 = vmatprep.subr.mxu0 0.0
        %386 = vmatpush1.msra.mxu0 %v265
        %387 = vmatprep.subr.mxu0 0.0
        %388 = vmatpush1.msra.mxu0 %v266
        %389 = vmatprep.subr.mxu0 0.0
        %390 = vmatpush1.msra.mxu0 %v267
        %391 = vmatprep.subr.mxu0 0.0
        %392 = vmatpush1.msra.mxu0 %v268
        %393 = vmatprep.subr.mxu0 0.0
        %394 = vmatpush1.msra.mxu0 %v269
        %395 = vmatprep.subr.mxu0 0.0
        %396 = vmatpush1.msra.mxu0 %v270
        %397 = vmatprep.subr.mxu0 0.0
        %398 = vmatpush1.msra.mxu0 0.0
        %399 = vmatprep.subr.mxu0 0.0
        %400 = vmatpush1.msra.mxu0 0.0
        %401 = vmatprep.subr.mxu0 0.0
        %402 = vmatpush1.msra.mxu0 0.0
        %403 = vmatprep.subr.mxu0 0.0
        %404 = vmatpush1.msra.mxu0 0.0
        %405 = vmatprep.subr.mxu0 0.0
        %406 = vmatpush1.msra.mxu0 0.0
        %407 = vmatprep.subr.mxu0 0.0
        %408 = vmatpush1.msra.mxu0 0.0
        %409 = vmatprep.subr.mxu0 0.0
        %410 = vmatpush1.msra.mxu0 0.0
        %411 = vmatprep.subr.mxu0 0.0
        %412 = vmatpush1.msra.mxu0 0.0
        %413 = vmatprep.subr.mxu0 0.0
        %414 = vmatpush1.msra.mxu0 0.0
        %415 = vmatprep.subr.mxu0 0.0
        %416 = vmatpush1.msra.mxu0 0.0
        %417 = vmatprep.subr.mxu0 0.0
        %418 = vmatpush1.msra.mxu0 0.0
        %419 = vmatprep.subr.mxu0 0.0
        %420 = vmatpush1.msra.mxu0 0.0
        %421 = vmatprep.subr.mxu0 0.0
        %422 = vmatpush1.msra.mxu0 0.0
        %423 = vmatprep.subr.mxu0 0.0
        %424 = vmatpush1.msra.mxu0 0.0
        %425 = vmatprep.subr.mxu0 0.0
        %426 = vmatpush1.msra.mxu0 0.0
        %427 = vmatprep.subr.mxu0 0.0
        %428 = vmatpush1.msra.mxu0 0.0
        %429 = vmatprep.mubr.f32.mxu0 0.0
        %430 = vmatmul.mubr.f32.gmra.mrb[0].mxu0 %v253
        %v431 = vpop.f32.mrb[0].mxu0
        %v432 = vadd.f32 %v362, %v431
        %v433 = vpop.f32.mrb[0].mxu0
        %434 = vdwg.mxu0
        %s435 = scalar_lea.vmem [#allocation2], 256
        %v436 = vld [vmem:[%s435] sm:$0xff]
        %v437 = vld [vmem:[%s435 + $0x8] sm:$0xff]
        %v438 = vld [vmem:[%s435 + $0x10] sm:$0xff]
        %v439 = vld [vmem:[%s435 + $0x18] sm:$0xff]
        %v440 = vld [vmem:[%s435 + $0x20] sm:$0xff]
        %v441 = vld [vmem:[%s435 + $0x28] sm:$0xff]
        %v442 = vld [vmem:[%s435 + $0x30] sm:$0xff]
        %v443 = vld [vmem:[%s435 + $0x38] sm:$0xff]
        %v444 = vld [vmem:[%s435 + $0x40] sm:$0xff]
        %v445 = vld [vmem:[%s435 + $0x48] sm:$0xff]
        %v446 = vld [vmem:[%s435 + $0x50] sm:$0xff]
        %v447 = vld [vmem:[%s435 + $0x58] sm:$0xff]
        %v448 = vld [vmem:[%s435 + $0x60] sm:$0xff]
        %v449 = vld [vmem:[%s435 + $0x68] sm:$0xff]
        %v450 = vld [vmem:[%s435 + $0x70] sm:$0xff]
        %v451 = vld [vmem:[%s435 + $0x78] sm:$0xff]
        %vm452 = vcmask 1045504
        %v453 = vrot.slane %v253, 2
        %v454 = vrot.slane %v254, 2
        %v455 = vsel %vm452, %v453, %v454
        %457 = vmatprep.subr.mxu0 0.0
        %458 = vmatpush1.msra.mxu0 %v436
        %459 = vmatprep.subr.mxu0 0.0
        %460 = vmatpush1.msra.mxu0 %v437
        %461 = vmatprep.subr.mxu0 0.0
        %462 = vmatpush1.msra.mxu0 %v438
        %463 = vmatprep.subr.mxu0 0.0
        %464 = vmatpush1.msra.mxu0 %v439
        %465 = vmatprep.subr.mxu0 0.0
        %466 = vmatpush1.msra.mxu0 %v440
        %467 = vmatprep.subr.mxu0 0.0
        %468 = vmatpush1.msra.mxu0 %v441
        %469 = vmatprep.subr.mxu0 0.0
        %470 = vmatpush1.msra.mxu0 %v442
        %471 = vmatprep.subr.mxu0 0.0
        %472 = vmatpush1.msra.mxu0 %v443
        %473 = vmatprep.subr.mxu0 0.0
        %474 = vmatpush1.msra.mxu0 %v444
        %475 = vmatprep.subr.mxu0 0.0
        %476 = vmatpush1.msra.mxu0 %v445
        %477 = vmatprep.subr.mxu0 0.0
        %478 = vmatpush1.msra.mxu0 %v446
        %479 = vmatprep.subr.mxu0 0.0
        %480 = vmatpush1.msra.mxu0 %v447
        %481 = vmatprep.subr.mxu0 0.0
        %482 = vmatpush1.msra.mxu0 %v448
        %483 = vmatprep.subr.mxu0 0.0
        %484 = vmatpush1.msra.mxu0 %v449
        %485 = vmatprep.subr.mxu0 0.0
        %486 = vmatpush1.msra.mxu0 %v450
        %487 = vmatprep.subr.mxu0 0.0
        %488 = vmatpush1.msra.mxu0 %v451
        %489 = vmatprep.subr.mxu0 0.0
        %490 = vmatpush1.msra.mxu0 0.0
        %491 = vmatprep.subr.mxu0 0.0
        %492 = vmatpush1.msra.mxu0 0.0
        %493 = vmatprep.subr.mxu0 0.0
        %494 = vmatpush1.msra.mxu0 0.0
        %495 = vmatprep.subr.mxu0 0.0
        %496 = vmatpush1.msra.mxu0 0.0
        %497 = vmatprep.subr.mxu0 0.0
        %498 = vmatpush1.msra.mxu0 0.0
        %499 = vmatprep.subr.mxu0 0.0
        %500 = vmatpush1.msra.mxu0 0.0
        %501 = vmatprep.subr.mxu0 0.0
        %502 = vmatpush1.msra.mxu0 0.0
        %503 = vmatprep.subr.mxu0 0.0
        %504 = vmatpush1.msra.mxu0 0.0
        %505 = vmatprep.subr.mxu0 0.0
        %506 = vmatpush1.msra.mxu0 0.0
        %507 = vmatprep.subr.mxu0 0.0
        %508 = vmatpush1.msra.mxu0 0.0
        %509 = vmatprep.subr.mxu0 0.0
        %510 = vmatpush1.msra.mxu0 0.0
        %511 = vmatprep.subr.mxu0 0.0
        %512 = vmatpush1.msra.mxu0 0.0
        %513 = vmatprep.subr.mxu0 0.0
        %514 = vmatpush1.msra.mxu0 0.0
        %515 = vmatprep.subr.mxu0 0.0
        %516 = vmatpush1.msra.mxu0 0.0
        %517 = vmatprep.subr.mxu0 0.0
        %518 = vmatpush1.msra.mxu0 0.0
        %519 = vmatprep.subr.mxu0 0.0
        %520 = vmatpush1.msra.mxu0 0.0
        %521 = vmatprep.mubr.f32.mxu0 0.0
        %522 = vmatmul.mubr.f32.gmra.mrb[0].mxu0 %v455
        %v523 = vpop.f32.mrb[0].mxu0
        %v524 = vadd.f32 0.0, %v523
        %v525 = vpop.f32.mrb[0].mxu0
        %526 = vdwg.mxu0
        %v527 = vadd.f32 %v432, %v524
        %v528 = vld [vmem:[%s3] sm:$0x1]
        %v530 = vlaneseq
        %v531 = vshrl.u32 %v530, 7
        %v532 = vsub.s32 0, %v531
        %v533 = vrot.slane %v528, %v532
        %v535 = vadd.f32 %v527, %v533
        %v536 = vmax.f32 %v535, 0.0
        %v538 = vrot.slane %v536, 7
        %vm540 = vcmask 1040384
        %v541 = vsel %vm540, 0.0, %v538
        %v542 = vsel %vm540, %v538, 0.0
        %v543 = vld [vmem:[#allocation5] sm:$0xff]
        %v544 = vld [vmem:[#allocation5 + $0x8] sm:$0xff]
        %v545 = vld [vmem:[#allocation5 + $0x10] sm:$0xff]
        %v546 = vld [vmem:[#allocation5 + $0x18] sm:$0xff]
        %v547 = vld [vmem:[#allocation5 + $0x20] sm:$0xff]
        %v548 = vld [vmem:[#allocation5 + $0x28] sm:$0xff]
        %v549 = vld [vmem:[#allocation5 + $0x30] sm:$0xff]
        %v550 = vld [vmem:[#allocation5 + $0x38] sm:$0xff]
        %v551 = vld [vmem:[#allocation5 + $0x40] sm:$0xff]
        %v552 = vld [vmem:[#allocation5 + $0x48] sm:$0xff]
        %v553 = vld [vmem:[#allocation5 + $0x50] sm:$0xff]
        %v554 = vld [vmem:[#allocation5 + $0x58] sm:$0xff]
        %v555 = vld [vmem:[#allocation5 + $0x60] sm:$0xff]
        %v556 = vld [vmem:[#allocation5 + $0x68] sm:$0xff]
        %v557 = vld [vmem:[#allocation5 + $0x70] sm:$0xff]
        %v558 = vld [vmem:[#allocation5 + $0x78] sm:$0xff]
        %s559 = scalar_lea.vmem [#allocation5], 128
        %v560 = vld [vmem:[%s559] sm:$0xff]
        %v561 = vld [vmem:[%s559 + $0x8] sm:$0xff]
        %v562 = vld [vmem:[%s559 + $0x10] sm:$0xff]
        %v563 = vld [vmem:[%s559 + $0x18] sm:$0xff]
        %v564 = vld [vmem:[%s559 + $0x20] sm:$0xff]
        %v565 = vld [vmem:[%s559 + $0x28] sm:$0xff]
        %v566 = vld [vmem:[%s559 + $0x30] sm:$0xff]
        %v567 = vld [vmem:[%s559 + $0x38] sm:$0xff]
        %v568 = vld [vmem:[%s559 + $0x40] sm:$0xff]
        %v569 = vld [vmem:[%s559 + $0x48] sm:$0xff]
        %v570 = vld [vmem:[%s559 + $0x50] sm:$0xff]
        %v571 = vld [vmem:[%s559 + $0x58] sm:$0xff]
        %v572 = vld [vmem:[%s559 + $0x60] sm:$0xff]
        %v573 = vld [vmem:[%s559 + $0x68] sm:$0xff]
        %v574 = vld [vmem:[%s559 + $0x70] sm:$0xff]
        %v575 = vld [vmem:[%s559 + $0x78] sm:$0xff]
        %v578 = vrot.slane %v541, 1
        %v579 = vrot.slane %v542, 1
        %v580 = vsel %vm290, %v578, %v579
        %582 = vmatprep.subr.mxu0 0.0
        %583 = vmatpush1.msra.mxu0 %v560
        %584 = vmatprep.subr.mxu0 0.0
        %585 = vmatpush1.msra.mxu0 %v561
        %586 = vmatprep.subr.mxu0 0.0
        %587 = vmatpush1.msra.mxu0 %v562
        %588 = vmatprep.subr.mxu0 0.0
        %589 = vmatpush1.msra.mxu0 %v563
        %590 = vmatprep.subr.mxu0 0.0
        %591 = vmatpush1.msra.mxu0 %v564
        %592 = vmatprep.subr.mxu0 0.0
        %593 = vmatpush1.msra.mxu0 %v565
        %594 = vmatprep.subr.mxu0 0.0
        %595 = vmatpush1.msra.mxu0 %v566
        %596 = vmatprep.subr.mxu0 0.0
        %597 = vmatpush1.msra.mxu0 %v567
        %598 = vmatprep.subr.mxu0 0.0
        %599 = vmatpush1.msra.mxu0 %v568
        %600 = vmatprep.subr.mxu0 0.0
        %601 = vmatpush1.msra.mxu0 %v569
        %602 = vmatprep.subr.mxu0 0.0
        %603 = vmatpush1.msra.mxu0 %v570
        %604 = vmatprep.subr.mxu0 0.0
        %605 = vmatpush1.msra.mxu0 %v571
        %606 = vmatprep.subr.mxu0 0.0
        %607 = vmatpush1.msra.mxu0 %v572
        %608 = vmatprep.subr.mxu0 0.0
        %609 = vmatpush1.msra.mxu0 %v573
        %610 = vmatprep.subr.mxu0 0.0
        %611 = vmatpush1.msra.mxu0 %v574
        %612 = vmatprep.subr.mxu0 0.0
        %613 = vmatpush1.msra.mxu0 %v575
        %614 = vmatprep.subr.mxu0 0.0
        %615 = vmatpush1.msra.mxu0 0.0
        %616 = vmatprep.subr.mxu0 0.0
        %617 = vmatpush1.msra.mxu0 0.0
        %618 = vmatprep.subr.mxu0 0.0
        %619 = vmatpush1.msra.mxu0 0.0
        %620 = vmatprep.subr.mxu0 0.0
        %621 = vmatpush1.msra.mxu0 0.0
        %622 = vmatprep.subr.mxu0 0.0
        %623 = vmatpush1.msra.mxu0 0.0
        %624 = vmatprep.subr.mxu0 0.0
        %625 = vmatpush1.msra.mxu0 0.0
        %626 = vmatprep.subr.mxu0 0.0
        %627 = vmatpush1.msra.mxu0 0.0
        %628 = vmatprep.subr.mxu0 0.0
        %629 = vmatpush1.msra.mxu0 0.0
        %630 = vmatprep.subr.mxu0 0.0
        %631 = vmatpush1.msra.mxu0 0.0
        %632 = vmatprep.subr.mxu0 0.0
        %633 = vmatpush1.msra.mxu0 0.0
        %634 = vmatprep.subr.mxu0 0.0
        %635 = vmatpush1.msra.mxu0 0.0
        %636 = vmatprep.subr.mxu0 0.0
        %637 = vmatpush1.msra.mxu0 0.0
        %638 = vmatprep.subr.mxu0 0.0
        %639 = vmatpush1.msra.mxu0 0.0
        %640 = vmatprep.subr.mxu0 0.0
        %641 = vmatpush1.msra.mxu0 0.0
        %642 = vmatprep.subr.mxu0 0.0
        %643 = vmatpush1.msra.mxu0 0.0
        %644 = vmatprep.subr.mxu0 0.0
        %645 = vmatpush1.msra.mxu0 0.0
        %646 = vmatprep.mubr.f32.mxu0 0.0
        %647 = vmatmul.mubr.f32.gmra.mrb[0].mxu0 %v580
        %v648 = vpop.f32.mrb[0].mxu0
        %v649 = vadd.f32 0.0, %v648
        %v650 = vpop.f32.mrb[0].mxu0
        %651 = vdwg.mxu0
        %652 = vmatprep.subr.mxu0 0.0
        %653 = vmatpush1.msra.mxu0 %v543
        %654 = vmatprep.subr.mxu0 0.0
        %655 = vmatpush1.msra.mxu0 %v544
        %656 = vmatprep.subr.mxu0 0.0
        %657 = vmatpush1.msra.mxu0 %v545
        %658 = vmatprep.subr.mxu0 0.0
        %659 = vmatpush1.msra.mxu0 %v546
        %660 = vmatprep.subr.mxu0 0.0
        %661 = vmatpush1.msra.mxu0 %v547
        %662 = vmatprep.subr.mxu0 0.0
        %663 = vmatpush1.msra.mxu0 %v548
        %664 = vmatprep.subr.mxu0 0.0
        %665 = vmatpush1.msra.mxu0 %v549
        %666 = vmatprep.subr.mxu0 0.0
        %667 = vmatpush1.msra.mxu0 %v550
        %668 = vmatprep.subr.mxu0 0.0
        %669 = vmatpush1.msra.mxu0 %v551
        %670 = vmatprep.subr.mxu0 0.0
        %671 = vmatpush1.msra.mxu0 %v552
        %672 = vmatprep.subr.mxu0 0.0
        %673 = vmatpush1.msra.mxu0 %v553
        %674 = vmatprep.subr.mxu0 0.0
        %675 = vmatpush1.msra.mxu0 %v554
        %676 = vmatprep.subr.mxu0 0.0
        %677 = vmatpush1.msra.mxu0 %v555
        %678 = vmatprep.subr.mxu0 0.0
        %679 = vmatpush1.msra.mxu0 %v556
        %680 = vmatprep.subr.mxu0 0.0
        %681 = vmatpush1.msra.mxu0 %v557
        %682 = vmatprep.subr.mxu0 0.0
        %683 = vmatpush1.msra.mxu0 %v558
        %684 = vmatprep.subr.mxu0 0.0
        %685 = vmatpush1.msra.mxu0 0.0
        %686 = vmatprep.subr.mxu0 0.0
        %687 = vmatpush1.msra.mxu0 0.0
        %688 = vmatprep.subr.mxu0 0.0
        %689 = vmatpush1.msra.mxu0 0.0
        %690 = vmatprep.subr.mxu0 0.0
        %691 = vmatpush1.msra.mxu0 0.0
        %692 = vmatprep.subr.mxu0 0.0
        %693 = vmatpush1.msra.mxu0 0.0
        %694 = vmatprep.subr.mxu0 0.0
        %695 = vmatpush1.msra.mxu0 0.0
        %696 = vmatprep.subr.mxu0 0.0
        %697 = vmatpush1.msra.mxu0 0.0
        %698 = vmatprep.subr.mxu0 0.0
        %699 = vmatpush1.msra.mxu0 0.0
        %700 = vmatprep.subr.mxu0 0.0
        %701 = vmatpush1.msra.mxu0 0.0
        %702 = vmatprep.subr.mxu0 0.0
        %703 = vmatpush1.msra.mxu0 0.0
        %704 = vmatprep.subr.mxu0 0.0
        %705 = vmatpush1.msra.mxu0 0.0
        %706 = vmatprep.subr.mxu0 0.0
        %707 = vmatpush1.msra.mxu0 0.0
        %708 = vmatprep.subr.mxu0 0.0
        %709 = vmatpush1.msra.mxu0 0.0
        %710 = vmatprep.subr.mxu0 0.0
        %711 = vmatpush1.msra.mxu0 0.0
        %712 = vmatprep.subr.mxu0 0.0
        %713 = vmatpush1.msra.mxu0 0.0
        %714 = vmatprep.subr.mxu0 0.0
        %715 = vmatpush1.msra.mxu0 0.0
        %716 = vmatprep.mubr.f32.mxu0 0.0
        %717 = vmatmul.mubr.f32.gmra.mrb[0].mxu0 %v541
        %v718 = vpop.f32.mrb[0].mxu0
        %v719 = vadd.f32 %v649, %v718
        %v720 = vpop.f32.mrb[0].mxu0
        %721 = vdwg.mxu0
        %s722 = scalar_lea.vmem [#allocation5], 256
        %v723 = vld [vmem:[%s722] sm:$0xff]
        %v724 = vld [vmem:[%s722 + $0x8] sm:$0xff]
        %v725 = vld [vmem:[%s722 + $0x10] sm:$0xff]
        %v726 = vld [vmem:[%s722 + $0x18] sm:$0xff]
        %v727 = vld [vmem:[%s722 + $0x20] sm:$0xff]
        %v728 = vld [vmem:[%s722 + $0x28] sm:$0xff]
        %v729 = vld [vmem:[%s722 + $0x30] sm:$0xff]
        %v730 = vld [vmem:[%s722 + $0x38] sm:$0xff]
        %v731 = vld [vmem:[%s722 + $0x40] sm:$0xff]
        %v732 = vld [vmem:[%s722 + $0x48] sm:$0xff]
        %v733 = vld [vmem:[%s722 + $0x50] sm:$0xff]
        %v734 = vld [vmem:[%s722 + $0x58] sm:$0xff]
        %v735 = vld [vmem:[%s722 + $0x60] sm:$0xff]
        %v736 = vld [vmem:[%s722 + $0x68] sm:$0xff]
        %v737 = vld [vmem:[%s722 + $0x70] sm:$0xff]
        %v738 = vld [vmem:[%s722 + $0x78] sm:$0xff]
        %v739 = vrot.slane %v541, 2
        %v740 = vrot.slane %v542, 2
        %v741 = vsel %vm452, %v739, %v740
        %743 = vmatprep.subr.mxu0 0.0
        %744 = vmatpush1.msra.mxu0 %v723
        %745 = vmatprep.subr.mxu0 0.0
        %746 = vmatpush1.msra.mxu0 %v724
        %747 = vmatprep.subr.mxu0 0.0
        %748 = vmatpush1.msra.mxu0 %v725
        %749 = vmatprep.subr.mxu0 0.0
        %750 = vmatpush1.msra.mxu0 %v726
        %751 = vmatprep.subr.mxu0 0.0
        %752 = vmatpush1.msra.mxu0 %v727
        %753 = vmatprep.subr.mxu0 0.0
        %754 = vmatpush1.msra.mxu0 %v728
        %755 = vmatprep.subr.mxu0 0.0
        %756 = vmatpush1.msra.mxu0 %v729
        %757 = vmatprep.subr.mxu0 0.0
        %758 = vmatpush1.msra.mxu0 %v730
        %759 = vmatprep.subr.mxu0 0.0
        %760 = vmatpush1.msra.mxu0 %v731
        %761 = vmatprep.subr.mxu0 0.0
        %762 = vmatpush1.msra.mxu0 %v732
        %763 = vmatprep.subr.mxu0 0.0
        %764 = vmatpush1.msra.mxu0 %v733
        %765 = vmatprep.subr.mxu0 0.0
        %766 = vmatpush1.msra.mxu0 %v734
        %767 = vmatprep.subr.mxu0 0.0
        %768 = vmatpush1.msra.mxu0 %v735
        %769 = vmatprep.subr.mxu0 0.0
        %770 = vmatpush1.msra.mxu0 %v736
        %771 = vmatprep.subr.mxu0 0.0
        %772 = vmatpush1.msra.mxu0 %v737
        %773 = vmatprep.subr.mxu0 0.0
        %774 = vmatpush1.msra.mxu0 %v738
        %775 = vmatprep.subr.mxu0 0.0
        %776 = vmatpush1.msra.mxu0 0.0
        %777 = vmatprep.subr.mxu0 0.0
        %778 = vmatpush1.msra.mxu0 0.0
        %779 = vmatprep.subr.mxu0 0.0
        %780 = vmatpush1.msra.mxu0 0.0
        %781 = vmatprep.subr.mxu0 0.0
        %782 = vmatpush1.msra.mxu0 0.0
        %783 = vmatprep.subr.mxu0 0.0
        %784 = vmatpush1.msra.mxu0 0.0
        %785 = vmatprep.subr.mxu0 0.0
        %786 = vmatpush1.msra.mxu0 0.0
        %787 = vmatprep.subr.mxu0 0.0
        %788 = vmatpush1.msra.mxu0 0.0
        %789 = vmatprep.subr.mxu0 0.0
        %790 = vmatpush1.msra.mxu0 0.0
        %791 = vmatprep.subr.mxu0 0.0
        %792 = vmatpush1.msra.mxu0 0.0
        %793 = vmatprep.subr.mxu0 0.0
        %794 = vmatpush1.msra.mxu0 0.0
        %795 = vmatprep.subr.mxu0 0.0
        %796 = vmatpush1.msra.mxu0 0.0
        %797 = vmatprep.subr.mxu0 0.0
        %798 = vmatpush1.msra.mxu0 0.0
        %799 = vmatprep.subr.mxu0 0.0
        %800 = vmatpush1.msra.mxu0 0.0
        %801 = vmatprep.subr.mxu0 0.0
        %802 = vmatpush1.msra.mxu0 0.0
        %803 = vmatprep.subr.mxu0 0.0
        %804 = vmatpush1.msra.mxu0 0.0
        %805 = vmatprep.subr.mxu0 0.0
        %806 = vmatpush1.msra.mxu0 0.0
        %807 = vmatprep.mubr.f32.mxu0 0.0
        %808 = vmatmul.mubr.f32.gmra.mrb[0].mxu0 %v741
        %v809 = vpop.f32.mrb[0].mxu0
        %v810 = vadd.f32 0.0, %v809
        %v811 = vpop.f32.mrb[0].mxu0
        %812 = vdwg.mxu0
        %v813 = vadd.f32 %v719, %v810
        %v814 = vld [vmem:[%s4] sm:$0x1]
        %v816 = vlaneseq
        %v817 = vshrl.u32 %v816, 7
        %v818 = vsub.s32 0, %v817
        %v819 = vrot.slane %v814, %v818
        %v821 = vadd.f32 %v813, %v819
        %v822 = vadd.f32 %v821, %v293
        %v823 = vmax.f32 %v822, 0.0
        %824 = vst [vmem:[%s247] sm:$0xff] %v823
        %s825 = sand.u32 %s139, 1
        %s826 = scalar_lea.sflag [#allocation4], %s825
        %s827 = sand.u32 %s139, 1
        %s828 = smul.addr %s827, 8
        %s829 = scalar_lea.vmem [#allocation7], %s828
        // Predicated region
        $region49: #{tpu_custom_call.1} parent=39 // pred_check
          %p830 = pneg %p149
        $region50: #{tpu_custom_call.1} parent=39 // pred_check_branch
          %832 = sbr.rel (%p830) target = $region52
        $region51: #{tpu_custom_call.1} parent=39 // pred_region
          %s834 = ssub.s32 128, 128
          %835 = vsyncadd %s826, %s834
          %s836 = smul.addr %s21, 128
          %s837 = scalar_lea.hbm %s5, %s836
          %s839 = sshll.u32 %s829, 4
          %s840 = int_to_ptr.vmem [resolvable:$true] %s839
          %842 = dma.vmem_to_hbm [thread:$0]  %s840, 128, %s837, %s826
        $region52: #{tpu_custom_call.1} parent=39 // pred_fallthru
          _
      $region40: #{tpu_custom_call.1} parent=5 // pred_fallthru
        _
      %p843 = scmp.le.s32.totalorder 2, %s16
      // Predicated region
      $region53: #{tpu_custom_call.1} parent=5 // pred_check
        %p844 = pneg %p843
      $region54: #{tpu_custom_call.1} parent=5 // pred_check_branch
        %846 = sbr.rel (%p844) target = $region56
      $region55: #{tpu_custom_call.1} parent=5 // pred_region
        %s847 = ssub.s32 %s16, 2
        // Predicated region
        $region57: #{tpu_custom_call.1} parent=55 // pred_check
          %p848 = pneg %p155
        $region58: #{tpu_custom_call.1} parent=55 // pred_check_branch
          %850 = sbr.rel (%p848) target = $region60
        $region59: #{tpu_custom_call.1} parent=55 // pred_region
          %s851 = sand.u32 %s140, 1
          %s852 = scalar_lea.sflag [#allocation4], %s851
          %s853 = sand.u32 %s140, 1
          %s854 = smul.addr %s853, 8
          %s855 = scalar_lea.vmem [#allocation7], %s854
          %856 = dma.done %s852, 128
        $region60: #{tpu_custom_call.1} parent=55 // pred_fallthru
          _
      $region56: #{tpu_custom_call.1} parent=5 // pred_fallthru
        _
    $region6: #{tpu_custom_call.1} parent=1 // loop_footer
      %s20 = sadd.s32 1, %s16
    $region7: #{tpu_custom_call.1} parent=1 // loop_footer_branch
      %15 = sbr.rel target = $region3
    $region8: #{tpu_custom_call.1} parent=1 // loop_exit
      _
    %857 = vsyncpa [#allocation3], 1
    %s858 = scalar_lea.sflag [#allocation3], 1
    %859 = vsyncpa %s858, 1
    %860 = vsyncpa [#allocation6], 1
    %861 = vsyncpa [#allocation4], 1
    %s862 = scalar_lea.sflag [#allocation4], 1
    %863 = vsyncpa %s862, 1

</llo_original>
